<compile_context>
chip_gen: v7x
topology: tpu7x:2x2x1
jax: 0.10.0
libtpu: 0.0.40
codegen_flags: <defaults>
</compile_context>

<pallas_src>
import functools
import math

import jax
import jax.numpy as jnp
from jax.experimental import pallas as pl
from jax.experimental.pallas import tpu as pltpu

_LANES = 128
_SUBLANES = 8
_ROW_ALIGN = 32          # packed-tile sublane multiple for int8/bool inputs
_MAX_BLOCK_ROWS = 8192   # 8192 x 128 x 4 B = 4 MiB per f32 input block
_CHUNK_ROWS = 512        # in-kernel compute chunk -> bounded f32 temporaries
_MIN_SPLIT_ROWS = 2 * _ROW_ALIGN


def _round_up(x, m):
    return ((x + m - 1) // m) * m


def _cdiv(a, b):
    return -(-a // b)


def _apply_margin_alpha(x, margin_alpha):
    """x ** margin_alpha: no-op for alpha==1, repeated VPU multiplies for small
    integer alpha (avoids the single-slot EUP pow path)."""
    if margin_alpha == 1.0:
        return x
    if float(margin_alpha).is_integer() and 2.0 <= margin_alpha <= 8.0:
        n = int(margin_alpha)
        y = x
        for _ in range(n - 1):
            y = y * x
        return y
    return jnp.power(x, jnp.float32(margin_alpha))


def _hinge_kernel(arc_ref, tgt_ref, mask_ref, out_ref, *,
                  block_rows, total_rows, min_margin, margin_alpha):
    """One lane-dense block.  Chunked loop over rows; two (8,128) f32
    accumulators; rows past the end of the array (partial last block) are
    masked out before the reduce.  Output block: rows 0..7 = pos partial,
    rows 8..15 = neg partial."""
    base_row = pl.program_id(0) * block_rows

    def chunk_partials(row0, nrows):
        sl = pl.ds(row0, nrows)
        s = arc_ref[sl, :].astype(jnp.float32)
        t = tgt_ref[sl, :].astype(jnp.float32)
        m = mask_ref[sl, :].astype(jnp.float32)

        non_gov = m - t * m                       # == (1 - t) * m
        # gold-arc term:      max(0, margin - s) on gold arcs
        p = jnp.maximum(min_margin - s, 0.0) * t
        p = _apply_margin_alpha(p, margin_alpha)
        # gold-non-arc term:  max(0, margin + s) on masked non-arcs
        q = jnp.maximum(min_margin + s, 0.0) * non_gov
        q = _apply_margin_alpha(q, margin_alpha)

        # Rows beyond the real array inside a partial last block hold garbage
        # in VMEM — zero their contribution (also kills any NaN from garbage).
        row_ids = base_row + row0 + jax.lax.broadcasted_iota(
            jnp.int32, (nrows, _LANES), 0)
        valid = row_ids < total_rows
        p = jnp.where(valid, p, 0.0)
        q = jnp.where(valid, q, 0.0)

        # Per-chunk (8,128) partials: leading-dim reduce = aligned vreg adds.
        pp = p.reshape(-1, _SUBLANES, _LANES).sum(axis=0)
        qq = q.reshape(-1, _SUBLANES, _LANES).sum(axis=0)
        return pp, qq

    p_acc = jnp.zeros((_SUBLANES, _LANES), jnp.float32)
    q_acc = jnp.zeros((_SUBLANES, _LANES), jnp.float32)

    n_full = block_rows // _CHUNK_ROWS
    rem = block_rows % _CHUNK_ROWS            # multiple of 32 -> multiple of 8

    if n_full > 0:
        def body(c, carry):
            pa, qa = carry
            row0 = pl.multiple_of(c * _CHUNK_ROWS, _CHUNK_ROWS)
            pp, qq = chunk_partials(row0, _CHUNK_ROWS)
            return pa + pp, qa + qq
        p_acc, q_acc = jax.lax.fori_loop(0, n_full, body, (p_acc, q_acc))

    if rem > 0:
        pp, qq = chunk_partials(n_full * _CHUNK_ROWS, rem)
        p_acc = p_acc + pp
        q_acc = q_acc + qq

    out_ref[0:_SUBLANES, :] = p_acc
    out_ref[_SUBLANES:2 * _SUBLANES, :] = q_acc


def binary_hinge_loss_with_mask(arc_scores, target_arc_adja, mask,
                                pos_neg_weights=None,
                                min_margin=1.0, margin_alpha=1.0):
    assert arc_scores.shape == target_arc_adja.shape == mask.shape

    n = int(math.prod(arc_scores.shape)) if arc_scores.shape else 1
    rows = max(_cdiv(n, _LANES), 1)

    if rows < _MIN_SPLIT_ROWS:
        # Tiny input: one block; pad rows to the packed-tile multiple (cheap).
        arr_rows = _round_up(rows, _ROW_ALIGN)
        block_rows = arr_rows
        num_blocks = 1
    else:
        # No row padding.  Even number of blocks (>= 2) so the "parallel" grid
        # axis feeds both v7x TensorCores; cap block size at _MAX_BLOCK_ROWS.
        arr_rows = rows
        nb = _cdiv(rows, _MAX_BLOCK_ROWS)
        nb = max(2, nb + (nb & 1))
        block_rows = min(_MAX_BLOCK_ROWS, _round_up(_cdiv(rows, nb), _ROW_ALIGN))
        num_blocks = _cdiv(rows, block_rows)

    pad_elems = arr_rows * _LANES - n   # < 128 except on the tiny-input path

    def _prep(x):
        # Keep narrow caller dtypes (bytes moved == runtime of this op), but
        # pre-cast bool -> int8 to avoid i1 refs in the kernel.
        if x.dtype == jnp.bool_:
            x = x.astype(jnp.int8)
        flat = x.reshape(-1)
        if pad_elems:
            # Only the sub-128 ragged tail (or a tiny input) is ever padded;
            # zero padding is exact: both hinge terms carry a t / (1-t)*m
            # factor that is 0 on the pad.
            flat = jnp.pad(flat, (0, pad_elems))
        return flat.reshape(arr_rows, _LANES)

    a2 = _prep(arc_scores)
    t2 = _prep(target_arc_adja)
    m2 = _prep(mask)

    kernel = functools.partial(
        _hinge_kernel,
        block_rows=block_rows,
        total_rows=arr_rows,
        min_margin=float(min_margin),
        margin_alpha=float(margin_alpha))

    out = pl.pallas_call(
        kernel,
        out_shape=jax.ShapeDtypeStruct((num_blocks * 2 * _SUBLANES, _LANES),
                                       jnp.float32),
        grid_spec=pltpu.PrefetchScalarGridSpec(
            num_scalar_prefetch=0,
            grid=(num_blocks,),
            in_specs=[
                pl.BlockSpec((block_rows, _LANES), lambda i: (i, 0)),
                pl.BlockSpec((block_rows, _LANES), lambda i: (i, 0)),
                pl.BlockSpec((block_rows, _LANES), lambda i: (i, 0)),
            ],
            out_specs=pl.BlockSpec((2 * _SUBLANES, _LANES), lambda i: (i, 0)),
        ),
        compiler_params=pltpu.CompilerParams(
            dimension_semantics=("parallel",),   # distinct out block per i
            vmem_limit_bytes=48 * 1024 * 1024,
        ),
    )(a2, t2, m2)

    # Tiny final reduction + optional weighting in plain JAX.
    parts = out.reshape(num_blocks, 2, _SUBLANES, _LANES)
    pos_sum = jnp.sum(parts[:, 0])
    neg_sum = jnp.sum(parts[:, 1])

    if pos_neg_weights is not None:
        w = pos_neg_weights.astype(jnp.float32)
        return pos_sum * w[0] + w[1] * neg_sum + 1.0 / jnp.sum(w ** 3)
    return pos_sum + neg_sum


def _reference(arc_scores, target_arc_adja, mask, pos_neg_weights=None,
               min_margin=1.0, margin_alpha=1.0):
    s = arc_scores.astype(jnp.float32)
    t = target_arc_adja.astype(jnp.float32)
    m = mask.astype(jnp.float32)
    non_gov = (1.0 - t) * m
    nge = min_margin - s
    nge = nge * ((nge > 0).astype(jnp.float32) * t)
    if margin_alpha != 1.0:
        nge = nge ** margin_alpha
    loss = jnp.sum(nge)
    if pos_neg_weights is not None:
        loss = loss * pos_neg_weights[0]
    nge = min_margin + s
    nge = nge * ((nge > 0).astype(jnp.float32) * non_gov)
    if margin_alpha != 1.0:
        nge = nge ** margin_alpha
    if pos_neg_weights is not None:
        loss = loss + pos_neg_weights[1] * jnp.sum(nge) \
               + 1.0 / jnp.sum(pos_neg_weights ** 3)
    else:
        loss = loss + jnp.sum(nge)
    return loss


if __name__ == "__main__":
    key = jax.random.PRNGKey(0)
    k1, k2, k3, k4, k5, k6 = jax.random.split(key, 6)

    B, S = 2, 8
    arc_scores = jax.random.normal(k1, (B, S, S), dtype=jnp.float32) * 2.0
    target_arc_adja = (jax.random.uniform(k2, (B, S, S)) > 0.7).astype(jnp.float32)
    mask = (jax.random.uniform(k3, (B, S, S)) > 0.2).astype(jnp.float32)
    pos_neg_weights = jnp.array([1.5, 0.5], dtype=jnp.float32)

    # case 1: no weights
    loss = jax.block_until_ready(
        binary_hinge_loss_with_mask(arc_scores, target_arc_adja, mask))
    ref = _reference(arc_scores, target_arc_adja, mask)
    assert jnp.allclose(loss, ref, rtol=1e-5, atol=1e-5), (loss, ref)

    # case 2: with pos/neg weights
    loss_w = jax.block_until_ready(
        binary_hinge_loss_with_mask(arc_scores, target_arc_adja, mask,
                                    pos_neg_weights=pos_neg_weights))
    ref_w = _reference(arc_scores, target_arc_adja, mask,
                       pos_neg_weights=pos_neg_weights)
    assert jnp.allclose(loss_w, ref_w, rtol=1e-5, atol=1e-5), (loss_w, ref_w)

    # case 3: narrow dtypes for target/mask (bool -> int8 wrapper cast path)
    loss_n = jax.block_until_ready(
        binary_hinge_loss_with_mask(arc_scores,
                                    target_arc_adja.astype(jnp.bool_),
                                    mask.astype(jnp.int8),
                                    pos_neg_weights=pos_neg_weights))
    assert jnp.allclose(loss_n, ref_w, rtol=1e-5, atol=1e-5), (loss_n, ref_w)

    # case 4: margin_alpha = 2 (integer-power VPU fast path)
    loss_a = jax.block_until_ready(
        binary_hinge_loss_with_mask(arc_scores, target_arc_adja, mask,
                                    margin_alpha=2.0))
    ref_a = _reference(arc_scores, target_arc_adja, mask, margin_alpha=2.0)
    assert jnp.allclose(loss_a, ref_a, rtol=1e-5, atol=1e-5), (loss_a, ref_a)

    # case 5: ragged shape -> exercises >=2 blocks, partial last block masking,
    # and the sub-128 tail pad (4*50*50 = 10000 elements, 79 rows of 128).
    s2 = jax.random.normal(k4, (4, 50, 50), dtype=jnp.float32) * 2.0
    t2 = (jax.random.uniform(k5, (4, 50, 50)) > 0.7).astype(jnp.float32)
    m2 = (jax.random.uniform(k6, (4, 50, 50)) > 0.2).astype(jnp.float32)
    loss_r = jax.block_until_ready(
        binary_hinge_loss_with_mask(s2, t2, m2, pos_neg_weights=pos_neg_weights))
    ref_r = _reference(s2, t2, m2, pos_neg_weights=pos_neg_weights)
    assert jnp.allclose(loss_r, ref_r, rtol=1e-4, atol=1e-4), (loss_r, ref_r)

    print("KERNEL_OK")
</pallas_src>

<mosaic_0001>
module attributes {stable_mosaic.version = 11 : i64} {
  func.func @_hinge_kernel(%arg0: i32, %arg1: memref<32x128xf32, #tpu.memory_space<vmem>>, %arg2: memref<32x128xf32, #tpu.memory_space<vmem>>, %arg3: memref<32x128xf32, #tpu.memory_space<vmem>>, %arg4: memref<16x128xf32, #tpu.memory_space<vmem>>) attributes {dimension_semantics = [#tpu.dimension_semantics<parallel>], iteration_bounds = array<i64: 1>, scalar_prefetch = 0 : i64, scratch_operands = 0 : i64, tpu.core_type = #tpu.core_type<tc>, window_params = [{transform_indices = @transform_0, window_bounds = array<i64: 32, 128>}, {transform_indices = @transform_1, window_bounds = array<i64: 32, 128>}, {transform_indices = @transform_2, window_bounds = array<i64: 32, 128>}, {transform_indices = @transform_3, window_bounds = array<i64: 16, 128>}]} {
    %c32_i32 = arith.constant 32 : i32
    %0 = arith.muli %arg0, %c32_i32 : i32
    %cst = arith.constant 0.000000e+00 : f32
    %1 = vector.broadcast %cst : f32 to vector<8x128xf32>
    %cst_0 = arith.constant 0.000000e+00 : f32
    %2 = vector.broadcast %cst_0 : f32 to vector<8x128xf32>
    %c0 = arith.constant 0 : index
    %c0_1 = arith.constant 0 : index
    %3 = vector.load %arg1[%c0, %c0_1] : memref<32x128xf32, #tpu.memory_space<vmem>>, vector<32x128xf32>
    %c0_2 = arith.constant 0 : index
    %c0_3 = arith.constant 0 : index
    %4 = vector.load %arg2[%c0_2, %c0_3] : memref<32x128xf32, #tpu.memory_space<vmem>>, vector<32x128xf32>
    %c0_4 = arith.constant 0 : index
    %c0_5 = arith.constant 0 : index
    %5 = vector.load %arg3[%c0_4, %c0_5] : memref<32x128xf32, #tpu.memory_space<vmem>>, vector<32x128xf32>
    %6 = arith.mulf %4, %5 : vector<32x128xf32>
    %7 = arith.subf %5, %6 : vector<32x128xf32>
    %cst_6 = arith.constant 1.000000e+00 : f32
    %8 = vector.broadcast %cst_6 : f32 to vector<32x128xf32>
    %9 = arith.subf %8, %3 : vector<32x128xf32>
    %cst_7 = arith.constant 0.000000e+00 : f32
    %10 = vector.broadcast %cst_7 : f32 to vector<32x128xf32>
    %11 = arith.maximumf %9, %10 : vector<32x128xf32>
    %12 = arith.mulf %11, %4 : vector<32x128xf32>
    %cst_8 = arith.constant 1.000000e+00 : f32
    %13 = vector.broadcast %cst_8 : f32 to vector<32x128xf32>
    %14 = arith.addf %13, %3 : vector<32x128xf32>
    %cst_9 = arith.constant 0.000000e+00 : f32
    %15 = vector.broadcast %cst_9 : f32 to vector<32x128xf32>
    %16 = arith.maximumf %14, %15 : vector<32x128xf32>
    %17 = arith.mulf %16, %7 : vector<32x128xf32>
    %c0_i32 = arith.constant 0 : i32
    %18 = arith.addi %0, %c0_i32 : i32
    %19 = tpu.iota {dimensions = array<i32: 0>} : vector<32x128xi32>
    %20 = vector.broadcast %18 : i32 to vector<32x128xi32>
    %21 = arith.addi %20, %19 : vector<32x128xi32>
    %c32_i32_10 = arith.constant 32 : i32
    %22 = vector.broadcast %c32_i32_10 : i32 to vector<32x128xi32>
    %23 = arith.cmpi slt, %21, %22 : vector<32x128xi32>
    %cst_11 = arith.constant 0.000000e+00 : f32
    %24 = vector.broadcast %cst_11 : f32 to vector<32x128xf32>
    %25 = arith.select %23, %12, %24 : vector<32x128xi1>, vector<32x128xf32>
    %cst_12 = arith.constant 0.000000e+00 : f32
    %26 = vector.broadcast %cst_12 : f32 to vector<32x128xf32>
    %27 = arith.select %23, %17, %26 : vector<32x128xi1>, vector<32x128xf32>
    %28 = vector.shape_cast %25 : vector<32x128xf32> to vector<4x8x128xf32>
    %cst_13 = arith.constant dense<0.000000e+00> : vector<8x128xf32>
    %29 = vector.multi_reduction <add>, %28, %cst_13 [0] : vector<4x8x128xf32> to vector<8x128xf32>
    %30 = vector.shape_cast %27 : vector<32x128xf32> to vector<4x8x128xf32>
    %cst_14 = arith.constant dense<0.000000e+00> : vector<8x128xf32>
    %31 = vector.multi_reduction <add>, %30, %cst_14 [0] : vector<4x8x128xf32> to vector<8x128xf32>
    %32 = arith.addf %1, %29 : vector<8x128xf32>
    %33 = arith.addf %2, %31 : vector<8x128xf32>
    %c0_15 = arith.constant 0 : index
    %c0_16 = arith.constant 0 : index
    %34 = vector.load %arg4[%c0_15, %c0_16] : memref<16x128xf32, #tpu.memory_space<vmem>>, vector<8x128xf32>
    tpu.vector_store %arg4[%c0_15, %c0_16], %32 {strides = array<i32>} : memref<16x128xf32, #tpu.memory_space<vmem>>, vector<8x128xf32>,
    %c8 = arith.constant 8 : index
    %c0_17 = arith.constant 0 : index
    %35 = vector.load %arg4[%c8, %c0_17] : memref<16x128xf32, #tpu.memory_space<vmem>>, vector<8x128xf32>
    tpu.vector_store %arg4[%c8, %c0_17], %33 {strides = array<i32>} : memref<16x128xf32, #tpu.memory_space<vmem>>, vector<8x128xf32>,
    return
  }
  func.func @transform_0(%arg0: i32) -> (i32, i32) {
    %c0_i32 = arith.constant 0 : i32
    %c0_i32_0 = arith.constant 0 : i32
    return %arg0, %c0_i32 : i32, i32
  }
  func.func @transform_1(%arg0: i32) -> (i32, i32) {
    %c0_i32 = arith.constant 0 : i32
    %c0_i32_0 = arith.constant 0 : i32
    return %arg0, %c0_i32 : i32, i32
  }
  func.func @transform_2(%arg0: i32) -> (i32, i32) {
    %c0_i32 = arith.constant 0 : i32
    %c0_i32_0 = arith.constant 0 : i32
    return %arg0, %c0_i32 : i32, i32
  }
  func.func @transform_3(%arg0: i32) -> (i32, i32) {
    %c0_i32 = arith.constant 0 : i32
    %c0_i32_0 = arith.constant 0 : i32
    return %arg0, %c0_i32 : i32, i32
  }
}

</mosaic_0001>

<llo_original>
// kernel: tpu_custom_call.1
$region0: #{tpu_custom_call.1}
  #allocation0 [shape = 'u32[]', space=smem, size = 0x4, offset = 0x4, fixed_abs, tag = 'smem constant byte address 0x4 - core index']
  #allocation1 [shape = 'u32[144,128]{1,0:T(1,128)}', space=vmem, size = 0x12000, scoped, tag = 'internal scratch']
  %s0 = inlined_call_operand.hbm [shape: f32[32,128], index: 0, kind: input, shape index: {}]
  %s1 = inlined_call_operand.hbm [shape: f32[32,128], index: 1, kind: input, shape index: {}]
  %s2 = inlined_call_operand.hbm [shape: f32[32,128], index: 2, kind: input, shape index: {}]
  %s3 = inlined_call_operand.hbm [shape: f32[16,128], index: 3, kind: output, shape index: {}]
  %s4 = sld [smem:[#allocation0]]
  $region34: #{tpu_custom_call.1} parent=0
    _
  %s6 = ssub.s32 1, %s4
  %s7 = scalar_select 0, %s6, %s4
  $region1: #{tpu_custom_call.1} parent=0
    #allocation2 [shape = 'u8[16384]{0}', space=vmem, size = 0x4000, scoped, tag = 'input window, operand 0, single buffered']
    #allocation3 [shape = 's32[1]{0}', space=sflag, size = 0x4, scoped, tag = 'scoped memory for tpu_custom_call.1']
    #allocation4 [shape = 's32[1]{0}', space=sflag, size = 0x4, scoped, tag = 'scoped memory for tpu_custom_call.1']
    #allocation5 [shape = 'u8[16384]{0}', space=vmem, size = 0x4000, scoped, tag = 'input window, operand 1, single buffered']
    #allocation6 [shape = 's32[1]{0}', space=sflag, size = 0x4, scoped, tag = 'scoped memory for tpu_custom_call.1']
    #allocation7 [shape = 'u8[16384]{0}', space=vmem, size = 0x4000, scoped, tag = 'input window, operand 2, single buffered']
    #allocation8 [shape = 'u8[8192]{0}', space=vmem, size = 0x2000, scoped, tag = 'output window, operand 0, single buffered']
    %8 = vsyncpa [#allocation3], 0
    %9 = vsyncpa [#allocation6], 0
    %10 = vsyncpa [#allocation4], 0
    // Predicated region
    $region2: #{tpu_custom_call.1} parent=1 // pred_check
      _
    $region3: #{tpu_custom_call.1} parent=1 // pred_check_branch
      %12 = sbr.rel (0) target = $region5
    $region4: #{tpu_custom_call.1} parent=1 // pred_region
      %s14 = ssub.s32 512, 512
      %15 = vsyncadd [#allocation3], %s14
      %s16 = sshll.u32 [#allocation2], 4
      %s17 = int_to_ptr.vmem [resolvable:$true] %s16
      %22 = dma.hbm_to_vmem [thread:$0]  %s0, 512, %s17, [#allocation3], 128, 128, 8
    $region5: #{tpu_custom_call.1} parent=1 // pred_fallthru
      _
    // Predicated region
    $region6: #{tpu_custom_call.1} parent=1 // pred_check
      _
    $region7: #{tpu_custom_call.1} parent=1 // pred_check_branch
      %24 = sbr.rel (0) target = $region9
    $region8: #{tpu_custom_call.1} parent=1 // pred_region
      %s26 = ssub.s32 512, 512
      %27 = vsyncadd [#allocation6], %s26
      %s28 = sshll.u32 [#allocation5], 4
      %s29 = int_to_ptr.vmem [resolvable:$true] %s28
      %34 = dma.hbm_to_vmem [thread:$0]  %s1, 512, %s29, [#allocation6], 128, 128, 8
    $region9: #{tpu_custom_call.1} parent=1 // pred_fallthru
      _
    // Predicated region
    $region10: #{tpu_custom_call.1} parent=1 // pred_check
      _
    $region11: #{tpu_custom_call.1} parent=1 // pred_check_branch
      %36 = sbr.rel (0) target = $region13
    $region12: #{tpu_custom_call.1} parent=1 // pred_region
      %s38 = ssub.s32 512, 512
      %39 = vsyncadd [#allocation6], %s38
      %s40 = sshll.u32 [#allocation7], 4
      %s41 = int_to_ptr.vmem [resolvable:$true] %s40
      %46 = dma.hbm_to_vmem [thread:$0]  %s2, 512, %s41, [#allocation6], 128, 128, 8
    $region13: #{tpu_custom_call.1} parent=1 // pred_fallthru
      _
    // Predicated region
    $region14: #{tpu_custom_call.1} parent=1 // pred_check
      _
    $region15: #{tpu_custom_call.1} parent=1 // pred_check_branch
      %48 = sbr.rel (0) target = $region17
    $region16: #{tpu_custom_call.1} parent=1 // pred_region
      %49 = dma.done [#allocation3], 512
    $region17: #{tpu_custom_call.1} parent=1 // pred_fallthru
      _
    // Predicated region
    $region18: #{tpu_custom_call.1} parent=1 // pred_check
      _
    $region19: #{tpu_custom_call.1} parent=1 // pred_check_branch
      %51 = sbr.rel (0) target = $region21
    $region20: #{tpu_custom_call.1} parent=1 // pred_region
      %52 = dma.done [#allocation6], 512
    $region21: #{tpu_custom_call.1} parent=1 // pred_fallthru
      _
    // Predicated region
    $region22: #{tpu_custom_call.1} parent=1 // pred_check
      _
    $region23: #{tpu_custom_call.1} parent=1 // pred_check_branch
      %54 = sbr.rel (0) target = $region25
    $region24: #{tpu_custom_call.1} parent=1 // pred_region
      %55 = dma.done [#allocation6], 512
    $region25: #{tpu_custom_call.1} parent=1 // pred_fallthru
      _
    %s56 = smul.u32 0, 32
    %v57 = vld [vmem:[#allocation2] sm:$0xff]
    %v58 = vld [vmem:[#allocation2 + $0x8] sm:$0xff]
    %v59 = vld [vmem:[#allocation2 + $0x10] sm:$0xff]
    %v60 = vld [vmem:[#allocation2 + $0x18] sm:$0xff]
    %v61 = vld [vmem:[#allocation5] sm:$0xff]
    %v62 = vld [vmem:[#allocation5 + $0x8] sm:$0xff]
    %v63 = vld [vmem:[#allocation5 + $0x10] sm:$0xff]
    %v64 = vld [vmem:[#allocation5 + $0x18] sm:$0xff]
    %v65 = vld [vmem:[#allocation7] sm:$0xff]
    %v66 = vld [vmem:[#allocation7 + $0x8] sm:$0xff]
    %v67 = vld [vmem:[#allocation7 + $0x10] sm:$0xff]
    %v68 = vld [vmem:[#allocation7 + $0x18] sm:$0xff]
    %v69 = vmul.f32 %v61, %v65
    %v70 = vmul.f32 %v62, %v66
    %v71 = vmul.f32 %v63, %v67
    %v72 = vmul.f32 %v64, %v68
    %v73 = vsub.f32 %v65, %v69
    %v74 = vsub.f32 %v66, %v70
    %v75 = vsub.f32 %v67, %v71
    %v76 = vsub.f32 %v68, %v72
    %v77 = vsub.f32 1.0, %v57
    %v78 = vsub.f32 1.0, %v58
    %v79 = vsub.f32 1.0, %v59
    %v80 = vsub.f32 1.0, %v60
    %v81 = vmax.f32 %v77, 0.0
    %v82 = vmax.f32 %v78, 0.0
    %v83 = vmax.f32 %v79, 0.0
    %v84 = vmax.f32 %v80, 0.0
    %v85 = vmul.f32 %v81, %v61
    %v86 = vmul.f32 %v82, %v62
    %v87 = vmul.f32 %v83, %v63
    %v88 = vmul.f32 %v84, %v64
    %v89 = vadd.f32 %v57, 1.0
    %v90 = vadd.f32 %v58, 1.0
    %v91 = vadd.f32 %v59, 1.0
    %v92 = vadd.f32 %v60, 1.0
    %v93 = vmax.f32 %v89, 0.0
    %v94 = vmax.f32 %v90, 0.0
    %v95 = vmax.f32 %v91, 0.0
    %v96 = vmax.f32 %v92, 0.0
    %v97 = vmul.f32 %v93, %v73
    %v98 = vmul.f32 %v94, %v74
    %v99 = vmul.f32 %v95, %v75
    %v100 = vmul.f32 %v96, %v76
    %v101 = vlaneseq
    %v102 = vshrl.u32 %v101, 7
    %v103 = vadd.s32 %v102, 8
    %v104 = vadd.s32 %v102, 16
    %v105 = vadd.s32 %v102, 24
    %v106 = vstv %s56
    %v107 = vadd.s32 %v106, %v102
    %v108 = vadd.s32 %v106, %v103
    %v109 = vadd.s32 %v106, %v104
    %v110 = vadd.s32 %v106, %v105
    %vm111 = vcmp.lt.s32.totalorder %v107, 32
    %vm112 = vcmp.lt.s32.totalorder %v108, 32
    %vm113 = vcmp.lt.s32.totalorder %v109, 32
    %vm114 = vcmp.lt.s32.totalorder %v110, 32
    %v115 = vsel %vm111, %v85, 0.0
    %v116 = vsel %vm112, %v86, 0.0
    %v117 = vsel %vm113, %v87, 0.0
    %v118 = vsel %vm114, %v88, 0.0
    %v119 = vsel %vm111, %v97, 0.0
    %v120 = vsel %vm112, %v98, 0.0
    %v121 = vsel %vm113, %v99, 0.0
    %v122 = vsel %vm114, %v100, 0.0
    %v123 = vadd.f32 %v115, %v116
    %v124 = vadd.f32 %v123, %v117
    %v125 = vadd.f32 %v124, %v118
    %v126 = vadd.f32 %v119, %v120
    %v127 = vadd.f32 %v126, %v121
    %v128 = vadd.f32 %v127, %v122
    %v129 = vadd.f32 %v125, 0.0
    %v130 = vadd.f32 %v128, 0.0
    %131 = vst [vmem:[#allocation8] sm:$0xff] %v129
    %132 = vst [vmem:[#allocation8 + $0x8] sm:$0xff] %v130
    // Predicated region
    $region26: #{tpu_custom_call.1} parent=1 // pred_check
      _
    $region27: #{tpu_custom_call.1} parent=1 // pred_check_branch
      %134 = sbr.rel (0) target = $region29
    $region28: #{tpu_custom_call.1} parent=1 // pred_region
      %s136 = ssub.s32 256, 256
      %137 = vsyncadd [#allocation4], %s136
      %s138 = sshll.u32 [#allocation8], 4
      %s139 = int_to_ptr.vmem [resolvable:$true] %s138
      %144 = dma.vmem_to_hbm [thread:$0]  %s139, 256, %s3, [#allocation4], 128, 128, 8
    $region29: #{tpu_custom_call.1} parent=1 // pred_fallthru
      _
    // Predicated region
    $region30: #{tpu_custom_call.1} parent=1 // pred_check
      _
    $region31: #{tpu_custom_call.1} parent=1 // pred_check_branch
      %146 = sbr.rel (0) target = $region33
    $region32: #{tpu_custom_call.1} parent=1 // pred_region
      %147 = dma.done [#allocation4], 256
    $region33: #{tpu_custom_call.1} parent=1 // pred_fallthru
      _
    %148 = vsyncpa [#allocation3], 1
    %149 = vsyncpa [#allocation6], 1
    %150 = vsyncpa [#allocation4], 1

</llo_original>
